<compile_context>
chip_gen: v5e
topology: v5e:2x2
jax: 0.10.0
libtpu: 0.0.40
codegen_flags: <defaults>
</compile_context>

<pallas_src>
import functools

import jax
import jax.numpy as jnp
import numpy as np
from jax.experimental import pallas as pl
from jax.experimental.pallas import tpu as pltpu


# --------------------------- block sizing ------------------------------------

_MIN_SPLIT_ROWS = 256  # batches below 2*this stay single-block (split not worth it)


def _vmem_plan():
    """(target output-block bytes, vmem_limit_bytes), sized per TPU generation.

    v5e/v6e report 128 MiB physical VMEM, v7x 64 MiB.  We take up to half the
    physical VMEM as an explicit scoped limit (the *default* scoped limit is
    only 16 MiB on v5e / 32 MiB on v6e/v7x) and size output blocks so the
    double-buffered output uses at most ~half of that limit.
    """
    cap = 64 * 1024 * 1024
    try:
        cap = int(pltpu.get_tpu_info().vmem_capacity_bytes)
    except Exception:
        pass
    limit = min(cap // 2, 64 * 1024 * 1024)
    target = max(2 * 1024 * 1024, min(limit // 4, 8 * 1024 * 1024))
    return target, limit


def _choose_block_rows(batch_rows, out_row_elems, target_bytes):
    """Rows per grid step.

    Byte-capped only (no artificial row cap), rounded to a sublane multiple of
    8.  For large batches we force at least 2 blocks so the "parallel" batch
    axis can be sharded across v7x's two TensorCores.
    """
    tb = max(8, (target_bytes // (out_row_elems * 4) // 8) * 8)
    if batch_rows >= 2 * _MIN_SPLIT_ROWS:
        half = -(-batch_rows // 2)
        tb = min(tb, ((half + 7) // 8) * 8)
    if batch_rows <= tb:
        return batch_rows  # single block == full array dims (no divisibility needed)
    return tb


# ----------------------------- kernels ---------------------------------------


def _sensory_kernel(x_ref, o_ref, *, num_timesteps, d_out):
    # x_ref: (TB, D) sensory rows; o_ref: (TB, T * d_out) lane-dense output.
    TB, D = x_ref.shape
    x = x_ref[...].astype(o_ref.dtype)          # cast in-kernel (no wrapper pass)
    if d_out > D:  # static branch: not indexing_embeddings_same_slots
        row = jnp.concatenate(
            [x, jnp.zeros((TB, d_out - D), dtype=o_ref.dtype)], axis=-1)
    else:
        row = x
    # Per-timestep static-slice stores: row-major layout of (T, d_out) without
    # materializing the full (TB, T*d_out) concatenated value.
    # TODO(synk): if the consumer tolerates a 128-padded feature dim, pad d_out
    # to a multiple of 128 here for fully unmasked lane-dense stores.
    for t in range(num_timesteps):
        o_ref[:, t * d_out:(t + 1) * d_out] = row


def _index_kernel(idx_ref, emb_ref, o_ref, *, num_timesteps, d_out):
    # idx_ref: (TB, 1) int32 indices; emb_ref: (NI, E) full table (VMEM-resident,
    # constant index_map); o_ref: (TB, T * d_out) lane-dense output.
    TB = idx_ref.shape[0]
    NI, E = emb_ref.shape
    idx = idx_ref[...]                           # (TB, 1) int32
    emb = emb_ref[...].astype(jnp.float32)
    if NI <= 16:
        # Exact vectorized gather: one broadcast+select per table row.
        rows = jnp.zeros((TB, E), dtype=jnp.float32)
        for n in range(NI):                      # static unroll (tiny NI)
            rows = jnp.where(idx == n, emb[n:n + 1, :], rows)
    else:
        # Large table: one-hot MXU matmul gather (f32 one-hot; v7x MXU has no
        # int path).  (TB, NI) x (NI, E) in the vext slot instead of O(NI) VPU ops.
        iota = jax.lax.broadcasted_iota(jnp.int32, (TB, NI), 1)
        one_hot = (iota == idx).astype(jnp.float32)
        rows = jnp.dot(one_hot, emb, preferred_element_type=jnp.float32)
    rows = rows.astype(o_ref.dtype)
    if d_out > E:  # static branch: not indexing_embeddings_same_slots
        row = jnp.concatenate(
            [jnp.zeros((TB, d_out - E), dtype=o_ref.dtype), rows], axis=-1)
    else:
        row = rows
    for t in range(num_timesteps):
        o_ref[:, t * d_out:(t + 1) * d_out] = row


# --------------------------- pallas wrappers ----------------------------------


@functools.partial(jax.jit, static_argnums=(1, 2))
def _sensory_forward(x_flat, num_timesteps, d_out):
    B, D = x_flat.shape
    row_elems = num_timesteps * d_out
    target, vmem_limit = _vmem_plan()
    tb = _choose_block_rows(B, row_elems, target)
    kernel = functools.partial(
        _sensory_kernel, num_timesteps=num_timesteps, d_out=d_out)
    # TODO(synk): the output is each row repeated T times; if the consumer is
    # another Pallas kernel, fuse there (and/or emit bf16) to kill the T-fold
    # HBM write amplification entirely.
    return pl.pallas_call(
        kernel,
        out_shape=jax.ShapeDtypeStruct((B, row_elems), jnp.float32),
        grid_spec=pltpu.PrefetchScalarGridSpec(
            num_scalar_prefetch=0,
            grid=(pl.cdiv(B, tb),),              # ragged edge block handled by Pallas
            in_specs=[pl.BlockSpec((tb, D), lambda b: (b, 0))],
            out_specs=pl.BlockSpec((tb, row_elems), lambda b: (b, 0)),
        ),
        compiler_params=pltpu.CompilerParams(
            dimension_semantics=("parallel",),
            vmem_limit_bytes=vmem_limit,
        ),
        cost_estimate=pl.CostEstimate(
            flops=0,
            transcendentals=0,
            bytes_accessed=B * D * x_flat.dtype.itemsize + B * row_elems * 4,
        ),
    )(x_flat)


@functools.partial(jax.jit, static_argnums=(2, 3))
def _index_forward(idx2d, emb_table, num_timesteps, d_out):
    B = idx2d.shape[0]
    NI, E = emb_table.shape
    row_elems = num_timesteps * d_out
    target, vmem_limit = _vmem_plan()
    tb = _choose_block_rows(B, row_elems, target)
    kernel = functools.partial(
        _index_kernel, num_timesteps=num_timesteps, d_out=d_out)
    flops = 2 * B * NI * E if NI > 16 else 0
    return pl.pallas_call(
        kernel,
        out_shape=jax.ShapeDtypeStruct((B, row_elems), jnp.float32),
        grid_spec=pltpu.PrefetchScalarGridSpec(
            num_scalar_prefetch=0,
            grid=(pl.cdiv(B, tb),),
            in_specs=[
                pl.BlockSpec((tb, 1), lambda b: (b, 0)),
                # Whole embedding table, constant index_map: fetched once and
                # kept resident in VMEM (no per-row gather DMAs).
                # TODO(synk): for a large production table, single-buffer it
                # (pipeline_mode=pl.Buffered(1)) or DMA once into VMEM scratch.
                pl.BlockSpec((NI, E), lambda b: (0, 0)),
            ],
            out_specs=pl.BlockSpec((tb, row_elems), lambda b: (b, 0)),
        ),
        compiler_params=pltpu.CompilerParams(
            dimension_semantics=("parallel",),
            vmem_limit_bytes=vmem_limit,
        ),
        cost_estimate=pl.CostEstimate(
            flops=flops,
            transcendentals=0,
            bytes_accessed=B * 4 + NI * E * 4 + B * row_elems * 4,
        ),
    )(idx2d, emb_table)


# ------------------------------- module ---------------------------------------


class AllowIndexInputModelBlock:
    """JAX/Pallas port.  underlying_input_block is the identity mapping
    (as asserted in the PyTorch InputModelBlock)."""

    def __init__(self, sensory_dim, num_indices, indexing_embeddings_same_slots, key):
        self.sensory_dim = int(sensory_dim)
        self.num_indices = int(num_indices)
        self.same_slots = bool(indexing_embeddings_same_slots)
        emb_dim = self.sensory_dim if self.same_slots else self.num_indices
        # nn.Embedding default init ~ N(0, 1), deterministic via PRNGKey.
        self.index_embeddings = jax.random.normal(
            key, (self.num_indices, emb_dim), dtype=jnp.float32
        )
        self.network_input_size = (
            self.sensory_dim if self.same_slots else self.sensory_dim + self.num_indices
        )

    def __call__(self, x, num_timesteps):
        batch_shape = x.shape[:-1]
        T = int(num_timesteps)
        if x.shape[-1] == self.sensory_dim:
            x_flat = x.reshape((-1, self.sensory_dim))      # cast happens in-kernel
            out = _sensory_forward(x_flat, T, self.network_input_size)
        else:
            assert x.shape[-1] == 1, (
                f"expects inputs ending in ({self.sensory_dim},) or 1, got {x.shape}"
            )
            idx2d = x.reshape((-1, 1)).astype(jnp.int32)
            out = _index_forward(
                idx2d, self.index_embeddings, T, self.network_input_size
            )
        # Lane-dense (B, T*d_out) -> (*batch, T, d_out): contiguous, free reshape.
        return out.reshape((*batch_shape, T, self.network_input_size))


# --------------------------- pure-JAX reference --------------------------------


def _reference(module, x, T):
    if x.shape[-1] == module.sensory_dim:
        ret = jnp.broadcast_to(
            x[..., None, :].astype(jnp.float32), (*x.shape[:-1], T, x.shape[-1])
        )
        if not module.same_slots:
            zeros = jnp.zeros((*ret.shape[:-1], module.num_indices), ret.dtype)
            ret = jnp.concatenate([ret, zeros], axis=-1)
        return ret
    idx = x[..., 0].astype(jnp.int32)
    embs = module.index_embeddings[idx]
    if not module.same_slots:
        zeros = jnp.zeros((*embs.shape[:-1], module.sensory_dim), embs.dtype)
        embs = jnp.concatenate([zeros, embs], axis=-1)
    return jnp.broadcast_to(embs[..., None, :], (*embs.shape[:-1], T, embs.shape[-1]))


# ------------------------------- main ------------------------------------------


if __name__ == "__main__":
    key = jax.random.PRNGKey(0)
    k_emb1, k_emb2, k_x, k_idx, k_xb, k_idxb = jax.random.split(key, 6)

    D = 32            # sensory / network input size of the underlying identity block
    NUM_IDX = 8       # num_indices
    T = 8             # num_timesteps
    batch = (2, 3)    # arbitrary leading batch dims

    x_sensory = jax.random.normal(k_x, (*batch, D), dtype=jnp.float32)
    x_index = jax.random.randint(k_idx, (*batch, 1), 0, NUM_IDX, dtype=jnp.int32)

    # ---- indexing_embeddings_same_slots = False (concat layout) ----
    blk_concat = AllowIndexInputModelBlock(D, NUM_IDX, False, k_emb1)
    out_s = jax.block_until_ready(blk_concat(x_sensory, T))
    out_i = jax.block_until_ready(blk_concat(x_index, T))
    np.testing.assert_allclose(out_s, _reference(blk_concat, x_sensory, T), atol=1e-6)
    np.testing.assert_allclose(out_i, _reference(blk_concat, x_index, T), atol=1e-6)
    assert out_s.shape == (*batch, T, D + NUM_IDX)
    assert out_i.shape == (*batch, T, D + NUM_IDX)

    # ---- indexing_embeddings_same_slots = True (shared slots) ----
    blk_same = AllowIndexInputModelBlock(D, NUM_IDX, True, k_emb2)
    out_s2 = jax.block_until_ready(blk_same(x_sensory, T))
    out_i2 = jax.block_until_ready(blk_same(x_index, T))
    np.testing.assert_allclose(out_s2, _reference(blk_same, x_sensory, T), atol=1e-6)
    np.testing.assert_allclose(out_i2, _reference(blk_same, x_index, T), atol=1e-6)
    assert out_s2.shape == (*batch, T, D)
    assert out_i2.shape == (*batch, T, D)

    # ---- larger batch exercising the multi-block grid with a ragged edge block ----
    BIG = 1100
    xb_sensory = jax.random.normal(k_xb, (BIG, D), dtype=jnp.float32)
    xb_index = jax.random.randint(k_idxb, (BIG, 1), 0, NUM_IDX, dtype=jnp.int32)
    out_bs = jax.block_until_ready(blk_concat(xb_sensory, T))
    out_bi = jax.block_until_ready(blk_concat(xb_index, T))
    np.testing.assert_allclose(out_bs, _reference(blk_concat, xb_sensory, T), atol=1e-6)
    np.testing.assert_allclose(out_bi, _reference(blk_concat, xb_index, T), atol=1e-6)
    assert out_bs.shape == (BIG, T, D + NUM_IDX)
    assert out_bi.shape == (BIG, T, D + NUM_IDX)

    print("KERNEL_OK")
</pallas_src>

<mosaic_0001>
module attributes {stable_mosaic.version = 11 : i64} {
  func.func @_sensory_kernel(%arg0: i32, %arg1: memref<6x32xf32, #tpu.memory_space<vmem>>, %arg2: memref<6x320xf32, #tpu.memory_space<vmem>>) attributes {dimension_semantics = [#tpu.dimension_semantics<parallel>], iteration_bounds = array<i64: 1>, scalar_prefetch = 0 : i64, scratch_operands = 0 : i64, tpu.core_type = #tpu.core_type<tc>, window_params = [{transform_indices = @transform_0, window_bounds = array<i64: 6, 32>}, {transform_indices = @transform_1, window_bounds = array<i64: 6, 320>}]} {
    %c0 = arith.constant 0 : index
    %c0_0 = arith.constant 0 : index
    %0 = vector.load %arg1[%c0, %c0_0] : memref<6x32xf32, #tpu.memory_space<vmem>>, vector<6x32xf32>
    %cst = arith.constant 0.000000e+00 : f32
    %1 = vector.broadcast %cst : f32 to vector<6x8xf32>
    %2 = tpu.concatenate %0, %1 in 1 : vector<6x32xf32>, vector<6x8xf32> -> vector<6x40xf32>
    %c0_1 = arith.constant 0 : index
    %c0_2 = arith.constant 0 : index
    %3 = vector.load %arg2[%c0_1, %c0_2] : memref<6x320xf32, #tpu.memory_space<vmem>>, vector<6x40xf32>
    tpu.vector_store %arg2[%c0_1, %c0_2], %2 {strides = array<i32>} : memref<6x320xf32, #tpu.memory_space<vmem>>, vector<6x40xf32>,
    %c0_3 = arith.constant 0 : index
    %c40 = arith.constant 40 : index
    %4 = vector.load %arg2[%c0_3, %c40] : memref<6x320xf32, #tpu.memory_space<vmem>>, vector<6x40xf32>
    tpu.vector_store %arg2[%c0_3, %c40], %2 {strides = array<i32>} : memref<6x320xf32, #tpu.memory_space<vmem>>, vector<6x40xf32>,
    %c0_4 = arith.constant 0 : index
    %c80 = arith.constant 80 : index
    %5 = vector.load %arg2[%c0_4, %c80] : memref<6x320xf32, #tpu.memory_space<vmem>>, vector<6x40xf32>
    tpu.vector_store %arg2[%c0_4, %c80], %2 {strides = array<i32>} : memref<6x320xf32, #tpu.memory_space<vmem>>, vector<6x40xf32>,
    %c0_5 = arith.constant 0 : index
    %c120 = arith.constant 120 : index
    %6 = vector.load %arg2[%c0_5, %c120] : memref<6x320xf32, #tpu.memory_space<vmem>>, vector<6x40xf32>
    tpu.vector_store %arg2[%c0_5, %c120], %2 {strides = array<i32>} : memref<6x320xf32, #tpu.memory_space<vmem>>, vector<6x40xf32>,
    %c0_6 = arith.constant 0 : index
    %c160 = arith.constant 160 : index
    %7 = vector.load %arg2[%c0_6, %c160] : memref<6x320xf32, #tpu.memory_space<vmem>>, vector<6x40xf32>
    tpu.vector_store %arg2[%c0_6, %c160], %2 {strides = array<i32>} : memref<6x320xf32, #tpu.memory_space<vmem>>, vector<6x40xf32>,
    %c0_7 = arith.constant 0 : index
    %c200 = arith.constant 200 : index
    %8 = vector.load %arg2[%c0_7, %c200] : memref<6x320xf32, #tpu.memory_space<vmem>>, vector<6x40xf32>
    tpu.vector_store %arg2[%c0_7, %c200], %2 {strides = array<i32>} : memref<6x320xf32, #tpu.memory_space<vmem>>, vector<6x40xf32>,
    %c0_8 = arith.constant 0 : index
    %c240 = arith.constant 240 : index
    %9 = vector.load %arg2[%c0_8, %c240] : memref<6x320xf32, #tpu.memory_space<vmem>>, vector<6x40xf32>
    tpu.vector_store %arg2[%c0_8, %c240], %2 {strides = array<i32>} : memref<6x320xf32, #tpu.memory_space<vmem>>, vector<6x40xf32>,
    %c0_9 = arith.constant 0 : index
    %c280 = arith.constant 280 : index
    %10 = vector.load %arg2[%c0_9, %c280] : memref<6x320xf32, #tpu.memory_space<vmem>>, vector<6x40xf32>
    tpu.vector_store %arg2[%c0_9, %c280], %2 {strides = array<i32>} : memref<6x320xf32, #tpu.memory_space<vmem>>, vector<6x40xf32>,
    return
  }
  func.func @transform_0(%arg0: i32) -> (i32, i32) {
    %c0_i32 = arith.constant 0 : i32
    %c0_i32_0 = arith.constant 0 : i32
    return %arg0, %c0_i32 : i32, i32
  }
  func.func @transform_1(%arg0: i32) -> (i32, i32) {
    %c0_i32 = arith.constant 0 : i32
    %c0_i32_0 = arith.constant 0 : i32
    return %arg0, %c0_i32 : i32, i32
  }
}

</mosaic_0001>

<llo_original>
// kernel: _sensory_forward.1
$region0: #{_sensory_forward.1}
  #allocation0 [shape = 'u32[]', space=smem, size = 0x4, offset = 0x4, fixed_abs, tag = 'smem constant byte address 0x4 - core index']
  #allocation1 [shape = 'u32[72,128]{1,0:T(1,128)}', space=vmem, size = 0x9000, scoped, tag = 'internal scratch']
  %s0 = inlined_call_operand.hbm [shape: f32[6,32], index: 0, kind: input, shape index: {}]
  %s1 = inlined_call_operand.hbm [shape: f32[6,320], index: 1, kind: output, shape index: {}]
  %s2 = sld [smem:[#allocation0]]
  $region18: #{_sensory_forward.1} parent=0
    _
  %s4 = ssub.s32 1, %s2
  %s5 = scalar_select 0, %s4, %s2
  $region1: #{_sensory_forward.1} parent=0
    #allocation2 [shape = 'u8[4096]{0}', space=vmem, size = 0x1000, scoped, tag = 'input window, operand 0, single buffered']
    #allocation3 [shape = 's32[1]{0}', space=sflag, size = 0x4, scoped, tag = 'scoped memory for _sensory_forward.1']
    #allocation4 [shape = 's32[1]{0}', space=sflag, size = 0x4, scoped, tag = 'scoped memory for _sensory_forward.1']
    #allocation5 [shape = 'u8[12288]{0}', space=vmem, size = 0x3000, scoped, tag = 'output window, operand 0, single buffered']
    %6 = vsyncpa [#allocation3], 0
    %7 = vsyncpa [#allocation4], 0
    // Predicated region
    $region2: #{_sensory_forward.1} parent=1 // pred_check
      _
    $region3: #{_sensory_forward.1} parent=1 // pred_check_branch
      %9 = sbr.rel (0) target = $region5
    $region4: #{_sensory_forward.1} parent=1 // pred_region
      %11 = vsyncadd [#allocation3], 0
      %s13 = sshll.u32 %s0, 4
      %s14 = int_to_ptr.hbm [resolvable:$true] %s13
      %s15 = sshll.u32 [#allocation2], 4
      %s16 = int_to_ptr.vmem [resolvable:$true] %s15
      %18 = dma.hbm_to_vmem [thread:$0]  %s14, 128, %s16, [#allocation3]
    $region5: #{_sensory_forward.1} parent=1 // pred_fallthru
      _
    // Predicated region
    $region6: #{_sensory_forward.1} parent=1 // pred_check
      _
    $region7: #{_sensory_forward.1} parent=1 // pred_check_branch
      %20 = sbr.rel (0) target = $region9
    $region8: #{_sensory_forward.1} parent=1 // pred_region
      %22 = dma.done [#allocation3], 128
    $region9: #{_sensory_forward.1} parent=1 // pred_fallthru
      _
    %v23 = vld [vmem:[#allocation2] sm:$0x3f]
    %vm24 = vcmask 261120
    %v25 = vsel %vm24, %v23, 0.0
    %vm26 = vcmask 324608
    %27 = vst.msk [vmem:[#allocation5] sm:$0x3f] %vm26, %v25
    %29 = vrot.lane.b32.xlu0 %v25, 40
    %v30 = vpop.permute.xlu0 %29
    %vm32 = vcmask 652608
    %33 = vst.msk [vmem:[#allocation5] sm:$0x3f] %vm32, %v30
    %34 = vrot.lane.b32.xlu0 %v25, 80
    %v35 = vpop.permute.xlu0 %34
    %vm37 = vcmask 980608
    %38 = vst.msk [vmem:[#allocation5] sm:$0x3f] %vm37, %v35
    %39 = vrot.lane.b32.xlu0 %v25, 120
    %v40 = vpop.permute.xlu0 %39
    %vm42 = vcmask 1046464
    %43 = vst.msk [vmem:[#allocation5] sm:$0x3f] %vm42, %v40
    %vm44 = vcmask 259072
    %45 = vst.msk [vmem:[#allocation5 + $0x8] sm:$0x3f] %vm44, %v40
    %46 = vrot.lane.b32.xlu0 %v25, 32
    %v47 = vpop.permute.xlu0 %46
    %vm49 = vcmask 587008
    %50 = vst.msk [vmem:[#allocation5 + $0x8] sm:$0x3f] %vm49, %v47
    %51 = vrot.lane.b32.xlu0 %v25, 72
    %v52 = vpop.permute.xlu0 %51
    %vm54 = vcmask 915008
    %55 = vst.msk [vmem:[#allocation5 + $0x8] sm:$0x3f] %vm54, %v52
    %56 = vrot.lane.b32.xlu0 %v25, 112
    %v57 = vpop.permute.xlu0 %56
    %vm59 = vcmask 1046400
    %60 = vst.msk [vmem:[#allocation5 + $0x8] sm:$0x3f] %vm59, %v57
    %vm61 = vcmask 193536
    %62 = vst.msk [vmem:[#allocation5 + $0x10] sm:$0x3f] %vm61, %v57
    %63 = vrot.lane.b32.xlu0 %v25, 24
    %v64 = vpop.permute.xlu0 %63
    %vm66 = vcmask 521408
    %67 = vst.msk [vmem:[#allocation5 + $0x10] sm:$0x3f] %vm66, %v64
    // Predicated region
    $region10: #{_sensory_forward.1} parent=1 // pred_check
      _
    $region11: #{_sensory_forward.1} parent=1 // pred_check_branch
      %69 = sbr.rel (0) target = $region13
    $region12: #{_sensory_forward.1} parent=1 // pred_region
      %71 = vsyncadd [#allocation4], 0
      %s73 = sshll.u32 [#allocation5], 4
      %s74 = int_to_ptr.vmem [resolvable:$true] %s73
      %s75 = sshll.u32 %s1, 4
      %s76 = int_to_ptr.hbm [resolvable:$true] %s75
      %78 = dma.vmem_to_hbm [thread:$0]  %s74, 384, %s76, [#allocation4]
    $region13: #{_sensory_forward.1} parent=1 // pred_fallthru
      _
    // Predicated region
    $region14: #{_sensory_forward.1} parent=1 // pred_check
      _
    $region15: #{_sensory_forward.1} parent=1 // pred_check_branch
      %80 = sbr.rel (0) target = $region17
    $region16: #{_sensory_forward.1} parent=1 // pred_region
      %82 = dma.done [#allocation4], 384
    $region17: #{_sensory_forward.1} parent=1 // pred_fallthru
      _
    %83 = vsyncpa [#allocation3], 1
    %84 = vsyncpa [#allocation4], 1

</llo_original>
